<compile_context>
chip_gen: v7x
topology: tpu7x:2x2x1
jax: 0.10.0
libtpu: 0.0.40
codegen_flags: <defaults>
</compile_context>

<pallas_src>
import functools

import jax
import jax.numpy as jnp
from jax.experimental import pallas as pl
from jax.experimental.pallas import tpu as pltpu


def _round_up(n, m):
    return ((n + m - 1) // m) * m


def timer_adapter_kernel(x_ref, w1_ref, b1_ref, w2_ref, b2_ref, g_ref, beta_ref,
                         o_ref, *, matmul_dtype, eps):
    """Fused forward: y = W2^T relu(W1^T x + b1) + b2 ; out = y + LayerNorm(y).

    The activation block arrives token-major (tile_n, E).  All compute runs with tokens on
    the 128-lane axis ((features, tile_n) orientation) so every vector op is lane-dense and
    the LayerNorm reduction is over a handful of sublanes; only the final result is flipped
    back to token-major for the store.  MXU operands use `matmul_dtype` with f32
    accumulation; all non-matmul math stays f32 (required on v5e, harmless elsewhere).
    """
    x_nat = x_ref[...]                               # (tile_n, E), natural layout
    if x_nat.dtype != matmul_dtype:
        x_nat = x_nat.astype(matmul_dtype)           # no-op if the producer already emits bf16

    # proj[0]: Linear(E -> H) + ReLU.  Contract E directly against x's last dim
    # (rhs-transposed matmul) -> (H, tile_n): tokens land on lanes without a separate
    # wrapper-side transpose pass.
    h = jax.lax.dot_general(
        w1_ref[...], x_nat,
        dimension_numbers=(((1,), (1,)), ((), ())),
        preferred_element_type=jnp.float32) + b1_ref[...]
    h = jnp.maximum(h, 0.0)                          # (H, tile_n), f32

    # proj[2]: Linear(H -> P)
    y = jnp.dot(w2_ref[...], h.astype(matmul_dtype),
                preferred_element_type=jnp.float32) + b2_ref[...]   # (P, tile_n), f32

    # pre_norm: LayerNorm over the feature axis (P sublanes), biased variance,
    # eps=1e-5 (matches nn.LayerNorm defaults), then the residual add.  All f32.
    mean = jnp.mean(y, axis=0, keepdims=True)
    var = jnp.mean((y - mean) * (y - mean), axis=0, keepdims=True)
    ln = (y - mean) * jax.lax.rsqrt(var + eps) * g_ref[...] + beta_ref[...]

    # Flip back to the natural (tile_n, P) layout for the store; this narrow XLU transpose
    # hides under the output DMA and saves the wrapper a full HBM round trip.
    o_ref[...] = (y + ln).T.astype(o_ref.dtype)


def timer_adapter(x, w1, b1, w2, b2, gamma, beta, *,
                  tile_n=None, matmul_dtype=jnp.bfloat16, out_dtype=None, eps=1e-5):
    """x: [B, S, encoder_dim] -> [B, S, project_dim].

    matmul_dtype: dtype of the MXU operands.  bf16 (default) is the fast path on every TPU
      generation; pass jnp.float32 for strict numerical parity with the f32 PyTorch module.
    out_dtype: output dtype (defaults to x.dtype).  bf16 halves store traffic of this
      memory-bound kernel if the downstream consumer tolerates it.
    """
    B, S, E = x.shape
    H = w1.shape[1]
    P = w2.shape[1]
    N = B * S
    matmul_dtype = jnp.dtype(matmul_dtype)
    out_dtype = jnp.dtype(x.dtype if out_dtype is None else out_dtype)

    # Token tiling.  The kernel is HBM-bound, so big tiles that amortize the ~0.35us
    # per-grid-step overhead are the dominant lever.  Small problems collapse to a single
    # step; large problems use up to 8192-token tiles split into an even number of
    # "parallel" steps so both v7x TensorCores get balanced work (harmless on 1-TC chips).
    # 8192-token blocks are ~16 MiB of double-buffered VMEM (the token-major blocks pad
    # their narrow minor dims to 128 lanes), under the 32 MiB limit requested below.
    if tile_n is None:
        if N <= 1024:
            tile_n = N                                   # single grid step
        else:
            n_steps = max(2, pl.cdiv(N, 8192))
            n_steps += n_steps % 2                       # even step count for v7x megacore
            tile_n = _round_up(pl.cdiv(N, n_steps), 128)
    grid_n = pl.cdiv(N, tile_n)    # last block may be partial; Pallas masks its edge DMA

    # ---- wrapper-side prep: free reshapes + one-time tiny weight casts only ----
    x2d = x.reshape(N, E)                       # no transpose / pad / cast HBM passes
    w1T = w1.T.astype(matmul_dtype)             # (H, E)  VMEM-resident across grid steps
    w2T = w2.T.astype(matmul_dtype)             # (P, H)
    b1c = b1.reshape(H, 1).astype(jnp.float32)  # bias / LN params stay f32 (v5e VPU rule)
    b2c = b2.reshape(P, 1).astype(jnp.float32)
    gc = gamma.reshape(P, 1).astype(jnp.float32)
    bc = beta.reshape(P, 1).astype(jnp.float32)

    flops = int(2 * N * (E * H + H * P))
    bytes_accessed = int(
        N * E * jnp.dtype(x.dtype).itemsize
        + w1T.size * matmul_dtype.itemsize + w2T.size * matmul_dtype.itemsize
        + 4 * (H + 3 * P)
        + N * P * out_dtype.itemsize)

    kernel = functools.partial(timer_adapter_kernel,
                               matmul_dtype=matmul_dtype, eps=eps)

    out2d = pl.pallas_call(
        kernel,
        out_shape=jax.ShapeDtypeStruct((N, P), out_dtype),
        grid_spec=pltpu.PrefetchScalarGridSpec(
            num_scalar_prefetch=0,
            grid=(grid_n,),
            in_specs=[
                # Activations: natural [token, feature] tiles along the token axis.
                # Double buffering suffices here (per-step DMA ~ compute); sweep
                # pipeline_mode=pl.Buffered(3) only if a trace shows exposed DMA.
                pl.BlockSpec((tile_n, E), lambda i: (i, 0)),
                # Weights / biases / LN params: constant index_maps -> fetched once and
                # kept VMEM-resident across grid steps (~a few KiB total).
                pl.BlockSpec((H, E), lambda i: (0, 0)),   # W1^T (matmul_dtype)
                pl.BlockSpec((H, 1), lambda i: (0, 0)),   # b1   (f32)
                pl.BlockSpec((P, H), lambda i: (0, 0)),   # W2^T (matmul_dtype)
                pl.BlockSpec((P, 1), lambda i: (0, 0)),   # b2   (f32)
                pl.BlockSpec((P, 1), lambda i: (0, 0)),   # LN gamma
                pl.BlockSpec((P, 1), lambda i: (0, 0)),   # LN beta
            ],
            out_specs=pl.BlockSpec((tile_n, P), lambda i: (i, 0)),
        ),
        compiler_params=pltpu.CompilerParams(
            dimension_semantics=("parallel",),
            vmem_limit_bytes=32 * 1024 * 1024),
        cost_estimate=pl.CostEstimate(
            flops=flops, transcendentals=int(N), bytes_accessed=bytes_accessed),
    )(x2d, w1T, b1c, w2T, b2c, gc, bc)

    return out2d.reshape(B, S, P)


if __name__ == "__main__":
    # Module config (small, consistent with the forward pass):
    encoder_dim = 32
    project_dim = 16
    hidden_dim = project_dim * 2  # default when hidden_dim is None

    B, S = 2, 8  # batch, sequence of "patch" tokens

    key = jax.random.PRNGKey(0)
    kx, k1, k2, k3, k4 = jax.random.split(key, 5)

    x = jax.random.normal(kx, (B, S, encoder_dim), dtype=jnp.float32)

    # Deterministic synthetic parameters (shapes match nn.Linear / nn.LayerNorm).
    w1 = jax.random.normal(k1, (encoder_dim, hidden_dim), dtype=jnp.float32) * 0.05
    b1 = jax.random.normal(k2, (hidden_dim,), dtype=jnp.float32) * 0.05
    w2 = jax.random.normal(k3, (hidden_dim, project_dim), dtype=jnp.float32) * 0.05
    b2 = jax.random.normal(k4, (project_dim,), dtype=jnp.float32) * 0.05
    gamma = jnp.ones((project_dim,), dtype=jnp.float32)   # nn.LayerNorm default weight
    beta = jnp.zeros((project_dim,), dtype=jnp.float32)   # nn.LayerNorm default bias

    out = timer_adapter(x, w1, b1, w2, b2, gamma, beta)
    out = jax.block_until_ready(out)
    assert out.shape == (B, S, project_dim)
    assert out.dtype == x.dtype

    # Reference 1: matched precision (bf16 MXU operands, f32 accumulate + f32 LN),
    # i.e. the exact numerics the kernel implements -> tight tolerance.
    def ref_matched(x):
        cd = jnp.bfloat16
        h = jnp.dot(x.astype(cd), w1.astype(cd),
                    preferred_element_type=jnp.float32) + b1
        h = jnp.maximum(h, 0.0)
        y = jnp.dot(h.astype(cd), w2.astype(cd),
                    preferred_element_type=jnp.float32) + b2
        mean = jnp.mean(y, axis=-1, keepdims=True)
        var = jnp.mean((y - mean) ** 2, axis=-1, keepdims=True)
        ln = (y - mean) * jax.lax.rsqrt(var + 1e-5) * gamma + beta
        return y + ln

    # Reference 2: pure f32 module semantics -> loose tolerance (bf16 matmul error budget).
    # (For strict parity vs. torch, call timer_adapter(..., matmul_dtype=jnp.float32).)
    def ref_f32(x):
        h = jnp.maximum(x @ w1 + b1, 0.0)
        y = h @ w2 + b2
        mean = jnp.mean(y, axis=-1, keepdims=True)
        var = jnp.mean((y - mean) ** 2, axis=-1, keepdims=True)
        ln = (y - mean) / jnp.sqrt(var + 1e-5) * gamma + beta
        return y + ln

    assert jnp.allclose(out, ref_matched(x), atol=1e-4, rtol=1e-4)
    assert jnp.allclose(out, ref_f32(x), atol=1e-1, rtol=1e-1)

    print("KERNEL_OK")
</pallas_src>

<mosaic_0001>
module attributes {stable_mosaic.version = 11 : i64} {
  func.func @timer_adapter_kernel(%arg0: i32, %arg1: memref<16x32xf32, #tpu.memory_space<vmem>>, %arg2: memref<32x32xbf16, #tpu.memory_space<vmem>>, %arg3: memref<32x1xf32, #tpu.memory_space<vmem>>, %arg4: memref<16x32xbf16, #tpu.memory_space<vmem>>, %arg5: memref<16x1xf32, #tpu.memory_space<vmem>>, %arg6: memref<16x1xf32, #tpu.memory_space<vmem>>, %arg7: memref<16x1xf32, #tpu.memory_space<vmem>>, %arg8: memref<16x16xf32, #tpu.memory_space<vmem>>) attributes {dimension_semantics = [#tpu.dimension_semantics<parallel>], iteration_bounds = array<i64: 1>, scalar_prefetch = 0 : i64, scratch_operands = 0 : i64, tpu.core_type = #tpu.core_type<tc>, window_params = [{transform_indices = @transform_0, window_bounds = array<i64: 16, 32>}, {pipeline_mode = #tpu.pipeline_mode<synchronous>, transform_indices = @transform_1, window_bounds = array<i64: 32, 32>}, {pipeline_mode = #tpu.pipeline_mode<synchronous>, transform_indices = @transform_2, window_bounds = array<i64: 32, 1>}, {pipeline_mode = #tpu.pipeline_mode<synchronous>, transform_indices = @transform_3, window_bounds = array<i64: 16, 32>}, {pipeline_mode = #tpu.pipeline_mode<synchronous>, transform_indices = @transform_4, window_bounds = array<i64: 16, 1>}, {pipeline_mode = #tpu.pipeline_mode<synchronous>, transform_indices = @transform_5, window_bounds = array<i64: 16, 1>}, {pipeline_mode = #tpu.pipeline_mode<synchronous>, transform_indices = @transform_6, window_bounds = array<i64: 16, 1>}, {transform_indices = @transform_7, window_bounds = array<i64: 16, 16>}]} {
    %c0 = arith.constant 0 : index
    %c0_0 = arith.constant 0 : index
    %0 = vector.load %arg1[%c0, %c0_0] : memref<16x32xf32, #tpu.memory_space<vmem>>, vector<16x32xf32>
    %1 = arith.truncf %0 : vector<16x32xf32> to vector<16x32xbf16>
    %c0_1 = arith.constant 0 : index
    %c0_2 = arith.constant 0 : index
    %2 = vector.load %arg2[%c0_1, %c0_2] : memref<32x32xbf16, #tpu.memory_space<vmem>>, vector<32x32xbf16>
    %cst = arith.constant dense<0.000000e+00> : vector<32x16xf32>
    %3 = tpu.matmul %2, %1, %cst {dimension_numbers = #tpu.dot_dimension_numbers<[1], [1], [0], [0], [0, 0, 1, 0], [], []>} : vector<32x32xbf16>, vector<16x32xbf16>, vector<32x16xf32> -> vector<32x16xf32>
    %c0_3 = arith.constant 0 : index
    %c0_4 = arith.constant 0 : index
    %4 = vector.load %arg3[%c0_3, %c0_4] : memref<32x1xf32, #tpu.memory_space<vmem>>, vector<32x1xf32>
    %5 = vector.broadcast %4 : vector<32x1xf32> to vector<32x16xf32>
    %6 = arith.addf %3, %5 : vector<32x16xf32>
    %cst_5 = arith.constant 0.000000e+00 : f32
    %7 = vector.broadcast %cst_5 : f32 to vector<32x16xf32>
    %8 = arith.maximumf %6, %7 : vector<32x16xf32>
    %c0_6 = arith.constant 0 : index
    %c0_7 = arith.constant 0 : index
    %9 = vector.load %arg4[%c0_6, %c0_7] : memref<16x32xbf16, #tpu.memory_space<vmem>>, vector<16x32xbf16>
    %10 = arith.truncf %8 : vector<32x16xf32> to vector<32x16xbf16>
    %cst_8 = arith.constant dense<0.000000e+00> : vector<16x16xf32>
    %11 = tpu.matmul %9, %10, %cst_8 {dimension_numbers = #tpu.dot_dimension_numbers<[1], [0], [0], [1], [0, 0, 1, 1], [], []>} : vector<16x32xbf16>, vector<32x16xbf16>, vector<16x16xf32> -> vector<16x16xf32>
    %c0_9 = arith.constant 0 : index
    %c0_10 = arith.constant 0 : index
    %12 = vector.load %arg5[%c0_9, %c0_10] : memref<16x1xf32, #tpu.memory_space<vmem>>, vector<16x1xf32>
    %13 = vector.broadcast %12 : vector<16x1xf32> to vector<16x16xf32>
    %14 = arith.addf %11, %13 : vector<16x16xf32>
    %cst_11 = arith.constant dense<0.000000e+00> : vector<16xf32>
    %15 = vector.multi_reduction <add>, %14, %cst_11 [0] : vector<16x16xf32> to vector<16xf32>
    %16 = vector.shape_cast %15 : vector<16xf32> to vector<1x16xf32>
    %cst_12 = arith.constant 1.600000e+01 : f32
    %17 = vector.broadcast %cst_12 : f32 to vector<1x16xf32>
    %18 = arith.divf %16, %17 : vector<1x16xf32>
    %19 = vector.broadcast %18 : vector<1x16xf32> to vector<16x16xf32>
    %20 = arith.subf %14, %19 : vector<16x16xf32>
    %21 = vector.broadcast %18 : vector<1x16xf32> to vector<16x16xf32>
    %22 = arith.subf %14, %21 : vector<16x16xf32>
    %23 = arith.mulf %20, %22 : vector<16x16xf32>
    %cst_13 = arith.constant dense<0.000000e+00> : vector<16xf32>
    %24 = vector.multi_reduction <add>, %23, %cst_13 [0] : vector<16x16xf32> to vector<16xf32>
    %25 = vector.shape_cast %24 : vector<16xf32> to vector<1x16xf32>
    %cst_14 = arith.constant 1.600000e+01 : f32
    %26 = vector.broadcast %cst_14 : f32 to vector<1x16xf32>
    %27 = arith.divf %25, %26 : vector<1x16xf32>
    %28 = vector.broadcast %18 : vector<1x16xf32> to vector<16x16xf32>
    %29 = arith.subf %14, %28 : vector<16x16xf32>
    %cst_15 = arith.constant 9.99999974E-6 : f32
    %30 = vector.broadcast %cst_15 : f32 to vector<1x16xf32>
    %31 = arith.addf %27, %30 : vector<1x16xf32>
    %32 = math.rsqrt %31 : vector<1x16xf32>
    %33 = vector.broadcast %32 : vector<1x16xf32> to vector<16x16xf32>
    %34 = arith.mulf %29, %33 : vector<16x16xf32>
    %c0_16 = arith.constant 0 : index
    %c0_17 = arith.constant 0 : index
    %35 = vector.load %arg6[%c0_16, %c0_17] : memref<16x1xf32, #tpu.memory_space<vmem>>, vector<16x1xf32>
    %36 = vector.broadcast %35 : vector<16x1xf32> to vector<16x16xf32>
    %37 = arith.mulf %34, %36 : vector<16x16xf32>
    %c0_18 = arith.constant 0 : index
    %c0_19 = arith.constant 0 : index
    %38 = vector.load %arg7[%c0_18, %c0_19] : memref<16x1xf32, #tpu.memory_space<vmem>>, vector<16x1xf32>
    %39 = vector.broadcast %38 : vector<16x1xf32> to vector<16x16xf32>
    %40 = arith.addf %37, %39 : vector<16x16xf32>
    %41 = arith.addf %14, %40 : vector<16x16xf32>
    %42 = tpu.transpose %41, [1, 0] : vector<16x16xf32> -> vector<16x16xf32>
    %c0_20 = arith.constant 0 : index
    %c0_21 = arith.constant 0 : index
    %43 = vector.load %arg8[%c0_20, %c0_21] : memref<16x16xf32, #tpu.memory_space<vmem>>, vector<16x16xf32>
    tpu.vector_store %arg8[%c0_20, %c0_21], %42 {strides = array<i32>} : memref<16x16xf32, #tpu.memory_space<vmem>>, vector<16x16xf32>,
    return
  }
  func.func @transform_0(%arg0: i32) -> (i32, i32) {
    %c0_i32 = arith.constant 0 : i32
    %c0_i32_0 = arith.constant 0 : i32
    return %arg0, %c0_i32 : i32, i32
  }
  func.func @transform_1(%arg0: i32) -> (i32, i32) {
    %c0_i32 = arith.constant 0 : i32
    %c0_i32_0 = arith.constant 0 : i32
    %c0_i32_1 = arith.constant 0 : i32
    return %c0_i32, %c0_i32_0 : i32, i32
  }
  func.func @transform_2(%arg0: i32) -> (i32, i32) {
    %c0_i32 = arith.constant 0 : i32
    %c0_i32_0 = arith.constant 0 : i32
    %c0_i32_1 = arith.constant 0 : i32
    return %c0_i32, %c0_i32_0 : i32, i32
  }
  func.func @transform_3(%arg0: i32) -> (i32, i32) {
    %c0_i32 = arith.constant 0 : i32
    %c0_i32_0 = arith.constant 0 : i32
    %c0_i32_1 = arith.constant 0 : i32
    return %c0_i32, %c0_i32_0 : i32, i32
  }
  func.func @transform_4(%arg0: i32) -> (i32, i32) {
    %c0_i32 = arith.constant 0 : i32
    %c0_i32_0 = arith.constant 0 : i32
    %c0_i32_1 = arith.constant 0 : i32
    return %c0_i32, %c0_i32_0 : i32, i32
  }
  func.func @transform_5(%arg0: i32) -> (i32, i32) {
    %c0_i32 = arith.constant 0 : i32
    %c0_i32_0 = arith.constant 0 : i32
    %c0_i32_1 = arith.constant 0 : i32
    return %c0_i32, %c0_i32_0 : i32, i32
  }
  func.func @transform_6(%arg0: i32) -> (i32, i32) {
    %c0_i32 = arith.constant 0 : i32
    %c0_i32_0 = arith.constant 0 : i32
    %c0_i32_1 = arith.constant 0 : i32
    return %c0_i32, %c0_i32_0 : i32, i32
  }
  func.func @transform_7(%arg0: i32) -> (i32, i32) {
    %c0_i32 = arith.constant 0 : i32
    %c0_i32_0 = arith.constant 0 : i32
    return %arg0, %c0_i32 : i32, i32
  }
}

</mosaic_0001>

<llo_original>
// kernel: tpu_custom_call.1
$region0: #{tpu_custom_call.1}
  #allocation0 [shape = 'u32[]', space=smem, size = 0x4, offset = 0x4, fixed_abs, tag = 'smem constant byte address 0x4 - core index']
  #allocation1 [shape = 'u32[144,128]{1,0:T(1,128)}', space=vmem, size = 0x12000, scoped, tag = 'internal scratch']
  %s0 = inlined_call_operand.vmem [shape: f32[16,32], index: 0, kind: input, shape index: {}]
  %s1 = inlined_call_operand.vmem [shape: bf16[32,32], index: 1, kind: input, shape index: {}]
  %s2 = inlined_call_operand.vmem [shape: f32[32,1], index: 2, kind: input, shape index: {}]
  %s3 = inlined_call_operand.vmem [shape: bf16[16,32], index: 3, kind: input, shape index: {}]
  %s4 = inlined_call_operand.vmem [shape: f32[16,1], index: 4, kind: input, shape index: {}]
  %s5 = inlined_call_operand.vmem [shape: f32[16,1], index: 5, kind: input, shape index: {}]
  %s6 = inlined_call_operand.vmem [shape: f32[16,1], index: 6, kind: input, shape index: {}]
  %s7 = inlined_call_operand.hbm [shape: f32[16,16], index: 7, kind: output, shape index: {}]
  %s8 = sld [smem:[#allocation0]]
  $region38: #{tpu_custom_call.1} parent=0
    _
  %s10 = ssub.s32 1, %s8
  %s11 = scalar_select 0, %s10, %s8
  $region1: #{tpu_custom_call.1} parent=0
    #allocation2 [shape = 'u8[8192]{0}', space=vmem, size = 0x2000, scoped, tag = 'output window, operand 0, single buffered']
    #allocation3 [shape = 's32[1]{0}', space=sflag, size = 0x4, scoped, tag = 'scoped memory for tpu_custom_call.1']
    %12 = vsyncpa [#allocation3], 0
    // Predicated region
    $region2: #{tpu_custom_call.1} parent=1 // pred_check
      _
    $region3: #{tpu_custom_call.1} parent=1 // pred_check_branch
      %14 = sbr.rel (0) target = $region5
    $region4: #{tpu_custom_call.1} parent=1 // pred_region
      _
    $region5: #{tpu_custom_call.1} parent=1 // pred_fallthru
      _
    // Predicated region
    $region6: #{tpu_custom_call.1} parent=1 // pred_check
      _
    $region7: #{tpu_custom_call.1} parent=1 // pred_check_branch
      %16 = sbr.rel (0) target = $region9
    $region8: #{tpu_custom_call.1} parent=1 // pred_region
      _
    $region9: #{tpu_custom_call.1} parent=1 // pred_fallthru
      _
    // Predicated region
    $region10: #{tpu_custom_call.1} parent=1 // pred_check
      _
    $region11: #{tpu_custom_call.1} parent=1 // pred_check_branch
      %18 = sbr.rel (0) target = $region13
    $region12: #{tpu_custom_call.1} parent=1 // pred_region
      _
    $region13: #{tpu_custom_call.1} parent=1 // pred_fallthru
      _
    // Predicated region
    $region14: #{tpu_custom_call.1} parent=1 // pred_check
      _
    $region15: #{tpu_custom_call.1} parent=1 // pred_check_branch
      %20 = sbr.rel (0) target = $region17
    $region16: #{tpu_custom_call.1} parent=1 // pred_region
      _
    $region17: #{tpu_custom_call.1} parent=1 // pred_fallthru
      _
    // Predicated region
    $region18: #{tpu_custom_call.1} parent=1 // pred_check
      _
    $region19: #{tpu_custom_call.1} parent=1 // pred_check_branch
      %22 = sbr.rel (0) target = $region21
    $region20: #{tpu_custom_call.1} parent=1 // pred_region
      _
    $region21: #{tpu_custom_call.1} parent=1 // pred_fallthru
      _
    // Predicated region
    $region22: #{tpu_custom_call.1} parent=1 // pred_check
      _
    $region23: #{tpu_custom_call.1} parent=1 // pred_check_branch
      %24 = sbr.rel (0) target = $region25
    $region24: #{tpu_custom_call.1} parent=1 // pred_region
      _
    $region25: #{tpu_custom_call.1} parent=1 // pred_fallthru
      _
    // Predicated region
    $region26: #{tpu_custom_call.1} parent=1 // pred_check
      _
    $region27: #{tpu_custom_call.1} parent=1 // pred_check_branch
      %26 = sbr.rel (0) target = $region29
    $region28: #{tpu_custom_call.1} parent=1 // pred_region
      _
    $region29: #{tpu_custom_call.1} parent=1 // pred_fallthru
      _
    %v28 = vld [vmem:[%s0] sm:$0xff]
    %v29 = vld [vmem:[%s0 + $0x8] sm:$0xff]
    %v30 = vpack.c.bf16 %v29, %v28
    %v31 = vld [vmem:[%s1] sm:$0xf]
    %v32 = vld [vmem:[%s1 + $0x4] sm:$0xf]
    %v33 = vld [vmem:[%s1 + $0x8] sm:$0xf]
    %v34 = vld [vmem:[%s1 + $0xc] sm:$0xf]
    %v35 = vld [vmem:[%s2] sm:$0xff]
    %v36 = vld [vmem:[%s2 + $0x8] sm:$0xff]
    %v37 = vld [vmem:[%s2 + $0x10] sm:$0xff]
    %v38 = vld [vmem:[%s2 + $0x18] sm:$0xff]
    %40 = vset.pattern.permute.xlu0 0
    %41 = vperm.xlu0 %40, %v35
    %v42 = vpop.permute.xlu0 %41
    %45 = vset.pattern.permute.xlu0 0
    %46 = vperm.xlu0 %45, %v36
    %v47 = vpop.permute.xlu0 %46
    %50 = vset.pattern.permute.xlu0 0
    %51 = vperm.xlu0 %50, %v37
    %v52 = vpop.permute.xlu0 %51
    %55 = vset.pattern.permute.xlu0 0
    %56 = vperm.xlu0 %55, %v38
    %v57 = vpop.permute.xlu0 %56
    %v63 = vunpack.c.l.b16 %v31
    %v64 = vunpack.c.l.b16 %v32
    %v65 = vunpack.c.l.b16 %v33
    %v66 = vunpack.c.l.b16 %v34
    %v67 = vpack.c.b16 %v64, %v63
    %v68 = vpack.c.b16 %v66, %v65
    %vm69 = vcmask 261120
    %v71 = vsel %vm69, %v67, 0
    %v74 = vsel %vm69, %v68, 0
    %v77 = vsel %vm69, %v30, 0
    %79 = vmatprep.subr.bf16.mxu0 0
    %80 = vmatpush1.bf16.xpose.msra.mxu0 %v77
    %81 = vmatprep.subr.bf16.mxu0 0
    %82 = vmatpush1.bf16.xpose.msra.mxu0 0
    %83 = vmatprep.subr.bf16.mxu0 0
    %84 = vmatpush1.bf16.xpose.msra.mxu0 0
    %85 = vmatprep.subr.bf16.mxu0 0
    %86 = vmatpush1.bf16.xpose.msra.mxu0 0
    %87 = vmatprep.subr.bf16.mxu0 0
    %88 = vmatpush1.bf16.xpose.msra.mxu0 0
    %89 = vmatprep.subr.bf16.mxu0 0
    %90 = vmatpush1.bf16.xpose.msra.mxu0 0
    %91 = vmatprep.subr.bf16.mxu0 0
    %92 = vmatpush1.bf16.xpose.msra.mxu0 0
    %93 = vmatprep.subr.bf16.mxu0 0
    %94 = vmatpush1.bf16.xpose.msra.mxu0 0
    %95 = vmatprep.subr.bf16.mxu0 0
    %96 = vmatpush1.bf16.xpose.msra.mxu0 0
    %97 = vmatprep.subr.bf16.mxu0 0
    %98 = vmatpush1.bf16.xpose.msra.mxu0 0
    %99 = vmatprep.subr.bf16.mxu0 0
    %100 = vmatpush1.bf16.xpose.msra.mxu0 0
    %101 = vmatprep.subr.bf16.mxu0 0
    %102 = vmatpush1.bf16.xpose.msra.mxu0 0
    %103 = vmatprep.subr.bf16.mxu0 0
    %104 = vmatpush1.bf16.xpose.msra.mxu0 0
    %105 = vmatprep.subr.bf16.mxu0 0
    %106 = vmatpush1.bf16.xpose.msra.mxu0 0
    %107 = vmatprep.subr.bf16.mxu0 0
    %108 = vmatpush1.bf16.xpose.msra.mxu0 0
    %109 = vmatprep.subr.bf16.mxu0 0
    %110 = vmatpush1.bf16.xpose.msra.mxu0 0
    %111 = vmatprep.mubr.bf16.mxu0 0
    %112 = vmatmul.mubr.bf16.gmra.mrb[0].mxu0 %v71
    %v113 = vpop.f32.mrb[0].mxu0
    %v114 = vadd.f32 %v42, %v113
    %v115 = vpop.f32.mrb[0].mxu0
    %v116 = vpop.f32.mrb[0].mxu0
    %v117 = vadd.f32 %v47, %v116
    %v118 = vpop.f32.mrb[0].mxu0
    %119 = vmatprep.mubr.bf16.mxu0 0
    %120 = vmatmul.mubr.bf16.gmra.mrb[0].mxu0 %v74
    %v121 = vpop.f32.mrb[0].mxu0
    %v122 = vadd.f32 %v52, %v121
    %v123 = vpop.f32.mrb[0].mxu0
    %v124 = vpop.f32.mrb[0].mxu0
    %v125 = vadd.f32 %v57, %v124
    %v126 = vpop.f32.mrb[0].mxu0
    %127 = vdwg.mxu0
    %v128 = vmax.f32 %v114, 0.0
    %v129 = vmax.f32 %v117, 0.0
    %v130 = vmax.f32 %v122, 0.0
    %v131 = vmax.f32 %v125, 0.0
    %v132 = vld [vmem:[%s3] sm:$0xf]
    %v133 = vld [vmem:[%s3 + $0x4] sm:$0xf]
    %v134 = vpack.c.bf16 %v129, %v128
    %v135 = vpack.c.bf16 %v131, %v130
    %v136 = vld [vmem:[%s4] sm:$0xff]
    %v137 = vld [vmem:[%s4 + $0x8] sm:$0xff]
    %139 = vset.pattern.permute.xlu0 0
    %140 = vperm.xlu0 %139, %v136
    %v141 = vpop.permute.xlu0 %140
    %144 = vset.pattern.permute.xlu0 0
    %145 = vperm.xlu0 %144, %v137
    %v146 = vpop.permute.xlu0 %145
    %v150 = vunpack.c.l.b16 %v132
    %v151 = vunpack.c.l.b16 %v133
    %v152 = vpack.c.b16 %v151, %v150
    %v154 = vsel %vm69, %v152, 0
    %156 = vmatprep.subr.bf16.mxu0 0
    %157 = vmatpush1.bf16.msra.mxu0 %v134
    %158 = vmatprep.subr.bf16.mxu0 0
    %159 = vmatpush1.bf16.msra.mxu0 %v135
    %160 = vmatprep.subr.bf16.mxu0 0
    %161 = vmatpush1.bf16.msra.mxu0 0
    %162 = vmatprep.subr.bf16.mxu0 0
    %163 = vmatpush1.bf16.msra.mxu0 0
    %164 = vmatprep.subr.bf16.mxu0 0
    %165 = vmatpush1.bf16.msra.mxu0 0
    %166 = vmatprep.subr.bf16.mxu0 0
    %167 = vmatpush1.bf16.msra.mxu0 0
    %168 = vmatprep.subr.bf16.mxu0 0
    %169 = vmatpush1.bf16.msra.mxu0 0
    %170 = vmatprep.subr.bf16.mxu0 0
    %171 = vmatpush1.bf16.msra.mxu0 0
    %172 = vmatprep.subr.bf16.mxu0 0
    %173 = vmatpush1.bf16.msra.mxu0 0
    %174 = vmatprep.subr.bf16.mxu0 0
    %175 = vmatpush1.bf16.msra.mxu0 0
    %176 = vmatprep.subr.bf16.mxu0 0
    %177 = vmatpush1.bf16.msra.mxu0 0
    %178 = vmatprep.subr.bf16.mxu0 0
    %179 = vmatpush1.bf16.msra.mxu0 0
    %180 = vmatprep.subr.bf16.mxu0 0
    %181 = vmatpush1.bf16.msra.mxu0 0
    %182 = vmatprep.subr.bf16.mxu0 0
    %183 = vmatpush1.bf16.msra.mxu0 0
    %184 = vmatprep.subr.bf16.mxu0 0
    %185 = vmatpush1.bf16.msra.mxu0 0
    %186 = vmatprep.subr.bf16.mxu0 0
    %187 = vmatpush1.bf16.msra.mxu0 0
    %188 = vmatprep.mubr.bf16.mxu0 0
    %189 = vmatmul.mubr.bf16.gmra.mrb[0].mxu0 %v154
    %v190 = vpop.f32.mrb[0].mxu0
    %v191 = vadd.f32 %v141, %v190
    %v192 = vpop.f32.mrb[0].mxu0
    %v193 = vpop.f32.mrb[0].mxu0
    %v194 = vadd.f32 %v146, %v193
    %v195 = vpop.f32.mrb[0].mxu0
    %196 = vdwg.mxu0
    %vm197 = vcmask 130048
    %v198 = vsel %vm197, %v191, 0.0
    %v199 = vsel %vm197, %v194, 0.0
    %v200 = vadd.f32 %v198, %v199
    %v201 = vrot.slane %v200, 4
    %v202 = vadd.f32 %v200, %v201
    %v203 = vrot.slane %v202, 2
    %v204 = vadd.f32 %v202, %v203
    %v205 = vrot.slane %v204, 1
    %v206 = vadd.f32 %v204, %v205
    %v207 = vrcp.pop 16.0
    %v208 = vmul.f32 %v206, %v207
    %v209 = vsub.f32 %v191, %v208
    %v210 = vsub.f32 %v194, %v208
    %v211 = vmul.f32 %v209, %v209
    %v212 = vmul.f32 %v210, %v210
    %v213 = vsel %vm197, %v211, 0.0
    %v214 = vsel %vm197, %v212, 0.0
    %v215 = vadd.f32 %v213, %v214
    %v216 = vrot.slane %v215, 4
    %v217 = vadd.f32 %v215, %v216
    %v218 = vrot.slane %v217, 2
    %v219 = vadd.f32 %v217, %v218
    %v220 = vrot.slane %v219, 1
    %v221 = vadd.f32 %v219, %v220
    %v222 = vmul.f32 %v221, %v207
    %v223 = vadd.f32 %v222, 1e-05
    %v224 = vrsqrt.pop %v223
    %v225 = vmul.f32 %v209, %v224
    %v226 = vmul.f32 %v210, %v224
    %v227 = vld [vmem:[%s5] sm:$0xff]
    %v228 = vld [vmem:[%s5 + $0x8] sm:$0xff]
    %230 = vset.pattern.permute.xlu0 0
    %231 = vperm.xlu0 %230, %v227
    %v232 = vpop.permute.xlu0 %231
    %235 = vset.pattern.permute.xlu0 0
    %236 = vperm.xlu0 %235, %v228
    %v237 = vpop.permute.xlu0 %236
    %v239 = vmul.f32 %v225, %v232
    %v240 = vmul.f32 %v226, %v237
    %v241 = vld [vmem:[%s6] sm:$0xff]
    %v242 = vld [vmem:[%s6 + $0x8] sm:$0xff]
    %244 = vset.pattern.permute.xlu0 0
    %245 = vperm.xlu0 %244, %v241
    %v246 = vpop.permute.xlu0 %245
    %249 = vset.pattern.permute.xlu0 0
    %250 = vperm.xlu0 %249, %v242
    %v251 = vpop.permute.xlu0 %250
    %v253 = vadd.f32 %v239, %v246
    %v254 = vadd.f32 %v240, %v251
    %v255 = vadd.f32 %v191, %v253
    %v256 = vadd.f32 %v194, %v254
    %257 = vxpose.xlu0.b32.start [1/16] %v255, 128
    %258 = vxpose.xlu0.b32.cont [2/16] %v256, 128
    %259 = vxpose.xlu0.b32.cont [3/16] 0.0, 128
    %260 = vxpose.xlu0.b32.cont [4/16] 0.0, 128
    %261 = vxpose.xlu0.b32.cont [5/16] 0.0, 128
    %262 = vxpose.xlu0.b32.cont [6/16] 0.0, 128
    %263 = vxpose.xlu0.b32.cont [7/16] 0.0, 128
    %264 = vxpose.xlu0.b32.cont [8/16] 0.0, 128
    %265 = vxpose.xlu0.b32.cont [9/16] 0.0, 128
    %266 = vxpose.xlu0.b32.cont [10/16] 0.0, 128
    %267 = vxpose.xlu0.b32.cont [11/16] 0.0, 128
    %268 = vxpose.xlu0.b32.cont [12/16] 0.0, 128
    %269 = vxpose.xlu0.b32.cont [13/16] 0.0, 128
    %270 = vxpose.xlu0.b32.cont [14/16] 0.0, 128
    %271 = vxpose.xlu0.b32.cont [15/16] 0.0, 128
    %272 = vxpose.xlu0.b32.end [16/16] 0.0, 128
    %v273 = vpop.trf.xlu0
    %v274 = vpop.trf.xlu0
    %v275 = vpop.trf.xlu0
    %v276 = vpop.trf.xlu0
    %v277 = vpop.trf.xlu0
    %v278 = vpop.trf.xlu0
    %v279 = vpop.trf.xlu0
    %v280 = vpop.trf.xlu0
    %v281 = vpop.trf.xlu0
    %v282 = vpop.trf.xlu0
    %v283 = vpop.trf.xlu0
    %v284 = vpop.trf.xlu0
    %v285 = vpop.trf.xlu0
    %v286 = vpop.trf.xlu0
    %v287 = vpop.trf.xlu0
    %v288 = vpop.trf.xlu0
    %289 = vst.msk [vmem:[#allocation2] sm:$0xff] %vm197, %v273
    %290 = vst.msk [vmem:[#allocation2 + $0x8] sm:$0xff] %vm197, %v274
    // Predicated region
    $region30: #{tpu_custom_call.1} parent=1 // pred_check
      _
    $region31: #{tpu_custom_call.1} parent=1 // pred_check_branch
      %292 = sbr.rel (0) target = $region33
    $region32: #{tpu_custom_call.1} parent=1 // pred_region
      %s294 = ssub.s32 256, 256
      %295 = vsyncadd [#allocation3], %s294
      %s296 = sshll.u32 [#allocation2], 4
      %s297 = int_to_ptr.vmem [resolvable:$true] %s296
      %302 = dma.vmem_to_hbm [thread:$0]  %s297, 256, %s7, [#allocation3], 128, 128, 8
    $region33: #{tpu_custom_call.1} parent=1 // pred_fallthru
      _
    // Predicated region
    $region34: #{tpu_custom_call.1} parent=1 // pred_check
      _
    $region35: #{tpu_custom_call.1} parent=1 // pred_check_branch
      %304 = sbr.rel (0) target = $region37
    $region36: #{tpu_custom_call.1} parent=1 // pred_region
      %305 = dma.done [#allocation3], 256
    $region37: #{tpu_custom_call.1} parent=1 // pred_fallthru
      _
    %306 = vsyncpa [#allocation3], 1

</llo_original>
